<compile_context>
chip_gen: v5e
topology: v5e:2x2
jax: 0.10.0
libtpu: 0.0.40
codegen_flags: <defaults>
</compile_context>

<pallas_src>
import functools

import jax
import jax.numpy as jnp
from jax import lax
from jax.experimental import pallas as pl
from jax.experimental.pallas import tpu as pltpu

LANES = 128
NCORES = 2  # leading "parallel" grid axis -> sharded across TCs on v7x


def _dice_kernel(p_ref, t_ref, out_ref, acc_int_ref, acc_uni_ref, *,
                 total_rows, block_rows, blocks_per_core, acc_rows, any_mask):
    """Accumulate sum(p*t) and sum(p+t) into per-core VMEM vector accumulators;
    write the per-core partial slabs on the last inner grid step."""
    c = pl.program_id(0)            # core-split index ("parallel")
    i = pl.program_id(1)            # row-block index within this core ("arbitrary")

    @pl.when(i == 0)
    def _():
        acc_int_ref[...] = jnp.zeros_like(acc_int_ref)
        acc_uni_ref[...] = jnp.zeros_like(acc_uni_ref)

    p = p_ref[...].astype(jnp.float32)
    t = t_ref[...].astype(jnp.float32)

    def accumulate(pv, tv):
        # vreg-aligned VPU accumulation; cross-lane reduce is deferred to the
        # wrapper (tiny), so the steady state is pure elementwise + adds.
        acc_int_ref[...] += (pv * tv).reshape(-1, acc_rows, LANES).sum(axis=0)
        acc_uni_ref[...] += (pv + tv).reshape(-1, acc_rows, LANES).sum(axis=0)

    if any_mask:
        # Global row-block index (index_map clamps the DMA; we mask the data).
        g = c * blocks_per_core + i
        needs_mask = (g + 1) * block_rows > total_rows

        @pl.when(jnp.logical_not(needs_mask))
        def _():                      # fast path: fully valid block, no mask
            accumulate(p, t)

        @pl.when(needs_mask)
        def _():                      # partial / fully-OOB block: zero pad rows
            row_ids = lax.broadcasted_iota(jnp.int32, (block_rows, 1), 0)
            valid = (row_ids + g * block_rows) < total_rows
            accumulate(jnp.where(valid, p, 0.0), jnp.where(valid, t, 0.0))
    else:
        accumulate(p, t)

    @pl.when(i == pl.num_programs(1) - 1)
    def _():
        out_ref[0, 0] = acc_int_ref[...]
        out_ref[0, 1] = acc_uni_ref[...]


def binary_dice_loss(logits, true, smooth=1e-06, block_rows=8192):
    """Pallas implementation of BinaryDiceLoss.forward (no sigmoid, matching
    the reference which uses `probs = logits`)."""
    p_flat = logits.reshape(-1)
    t_flat = true.reshape(-1)
    n = p_flat.shape[0]

    rows = n // LANES
    rem = n - rows * LANES

    tail_int = jnp.float32(0.0)
    tail_uni = jnp.float32(0.0)
    if rows == 0:
        # Degenerate (<128 elements): pad to one lane-row (zeros are sum-neutral).
        pad = LANES - n
        p_flat = jnp.pad(p_flat, (0, pad))
        t_flat = jnp.pad(t_flat, (0, pad))
        rows, rem = 1, 0
    elif rem:
        # Ragged lane tail (<128 elements): summed in the wrapper; the kernel
        # gets the lane-aligned prefix (no full-array pad copy).
        p_tail = p_flat[rows * LANES:].astype(jnp.float32)
        t_tail = t_flat[rows * LANES:].astype(jnp.float32)
        tail_int = jnp.sum(p_tail * t_tail)
        tail_uni = jnp.sum(p_tail) + jnp.sum(t_tail)
        p_flat = p_flat[: rows * LANES]
        t_flat = t_flat[: rows * LANES]

    p2d = p_flat.reshape(rows, LANES)
    t2d = t_flat.reshape(rows, LANES)

    # Sublane multiple required by the narrowest input dtype
    # (f32 -> 8, bf16/f16 -> 16, int8/bool -> 32).
    itemsize = min(p2d.dtype.itemsize, t2d.dtype.itemsize)
    required = (4 // max(itemsize, 1)) * 8

    if rows < required:
        br = rows                          # full extent is always a legal block
    else:
        br = min(block_rows, rows)
        br = (br // required) * required   # keep sublane tiling legal
    grid_rows = pl.cdiv(rows, br)                    # total row-blocks
    blocks_per_core = pl.cdiv(grid_rows, NCORES)     # inner (arbitrary) extent
    any_mask = (NCORES * blocks_per_core * br) != rows

    if br % 32 == 0:
        acc_rows = 32       # wider accumulator -> more independent add chains
    elif br % 8 == 0:
        acc_rows = 8
    else:
        acc_rows = br       # tiny-input case: br == rows < 8

    def in_map(c, i):
        # Clamp so trailing (fully OOB) steps of the uneven core split re-read
        # the last valid block; the in-kernel mask zeroes their contribution.
        return (jnp.minimum(c * blocks_per_core + i, grid_rows - 1), 0)

    kernel = functools.partial(
        _dice_kernel,
        total_rows=rows,
        block_rows=br,
        blocks_per_core=blocks_per_core,
        acc_rows=acc_rows,
        any_mask=any_mask,
    )

    partials = pl.pallas_call(
        kernel,
        out_shape=jax.ShapeDtypeStruct((NCORES, 2, acc_rows, LANES), jnp.float32),
        grid_spec=pltpu.PrefetchScalarGridSpec(
            num_scalar_prefetch=0,
            grid=(NCORES, blocks_per_core),
            in_specs=[
                pl.BlockSpec((br, LANES), in_map),
                pl.BlockSpec((br, LANES), in_map),
            ],
            out_specs=pl.BlockSpec((1, 2, acc_rows, LANES),
                                   lambda c, i: (c, 0, 0, 0)),
            scratch_shapes=[
                pltpu.VMEM((acc_rows, LANES), jnp.float32),
                pltpu.VMEM((acc_rows, LANES), jnp.float32),
            ],
        ),
        compiler_params=pltpu.CompilerParams(
            dimension_semantics=("parallel", "arbitrary"),
            vmem_limit_bytes=40 * 1024 * 1024,
        ),
    )(p2d, t2d)

    # Final scalar math in the wrapper (per-core partials + ragged tail).
    intersection = jnp.sum(partials[:, 0]) + tail_int
    union = jnp.sum(partials[:, 1]) + tail_uni
    dice_score = (2.0 * intersection + smooth) / (union + smooth)
    return 1.0 - dice_score


def binary_dice_loss_ref(logits, true, smooth=1e-06):
    """Pure-JAX reference of the PyTorch forward."""
    p = logits.reshape(-1).astype(jnp.float32)
    t = true.reshape(-1).astype(jnp.float32)
    intersection = jnp.sum(p * t)
    union = jnp.sum(p) + jnp.sum(t)
    return 1.0 - (2.0 * intersection + smooth) / (union + smooth)


if __name__ == "__main__":
    key = jax.random.PRNGKey(0)
    k1, k2, k3, k4 = jax.random.split(key, 4)

    # Test 1: small (N, 1, H, W) f32 -> rows=4 < 8, full-extent block, the
    # second core's slice is fully OOB and masked to zero.
    logits = jax.random.normal(k1, (2, 1, 16, 16), dtype=jnp.float32)
    true = (jax.random.uniform(k2, (2, 1, 16, 16)) > 0.5).astype(jnp.float32)
    loss = jax.block_until_ready(binary_dice_loss(logits, true))
    ref = binary_dice_loss_ref(logits, true)
    assert jnp.allclose(loss, ref, atol=1e-5, rtol=1e-5), (loss, ref)

    # Test 2: 108 rows -> 104-row block, 2 global blocks split across the
    # 2-way parallel axis, dynamic tail mask on the partial block only.
    logits2 = jax.random.normal(k3, (3, 1, 48, 96), dtype=jnp.float32)
    true2 = (jax.random.uniform(k4, (3, 1, 48, 96)) > 0.5).astype(jnp.float32)
    loss2 = jax.block_until_ready(binary_dice_loss(logits2, true2))
    ref2 = binary_dice_loss_ref(logits2, true2)
    assert jnp.allclose(loss2, ref2, atol=1e-5, rtol=1e-5), (loss2, ref2)

    # Test 3: native narrow dtypes (bf16 logits, int8 mask), no wrapper upcast.
    logits3 = jax.random.normal(k1, (2, 1, 16, 16), dtype=jnp.bfloat16)
    true3 = (jax.random.uniform(k2, (2, 1, 16, 16)) > 0.5).astype(jnp.int8)
    loss3 = jax.block_until_ready(binary_dice_loss(logits3, true3))
    ref3 = binary_dice_loss_ref(logits3, true3)
    assert jnp.allclose(loss3, ref3, atol=1e-5, rtol=1e-5), (loss3, ref3)

    # Test 4: numel not a multiple of 128 (2*1*17*17 = 578) -> lane-aligned
    # prefix goes through the kernel, 66-element tail summed in the wrapper.
    logits4 = jax.random.normal(k3, (2, 1, 17, 17), dtype=jnp.float32)
    true4 = (jax.random.uniform(k4, (2, 1, 17, 17)) > 0.5).astype(jnp.float32)
    loss4 = jax.block_until_ready(binary_dice_loss(logits4, true4))
    ref4 = binary_dice_loss_ref(logits4, true4)
    assert jnp.allclose(loss4, ref4, atol=1e-5, rtol=1e-5), (loss4, ref4)

    print("KERNEL_OK")
</pallas_src>

<mosaic_0001>
module attributes {stable_mosaic.version = 11 : i64} {
  func.func @_dice_kernel(%arg0: i32, %arg1: i32, %arg2: memref<4x128xf32, #tpu.memory_space<vmem>>, %arg3: memref<4x128xf32, #tpu.memory_space<vmem>>, %arg4: memref<1x2x4x128xf32, #tpu.memory_space<vmem>>, %arg5: memref<4x128xf32, #tpu.memory_space<vmem>>, %arg6: memref<4x128xf32, #tpu.memory_space<vmem>>) attributes {dimension_semantics = [#tpu.dimension_semantics<parallel>, #tpu.dimension_semantics<arbitrary>], iteration_bounds = array<i64: 2, 1>, scalar_prefetch = 0 : i64, scratch_operands = 2 : i64, tpu.core_type = #tpu.core_type<tc>, window_params = [{transform_indices = @transform_0, window_bounds = array<i64: 4, 128>}, {transform_indices = @transform_1, window_bounds = array<i64: 4, 128>}, {transform_indices = @transform_2, window_bounds = array<i64: 1, 2, 4, 128>}]} {
    %c0_i32 = arith.constant 0 : i32
    %0 = arith.cmpi eq, %arg1, %c0_i32 : i32
    %1 = arith.extui %0 : i1 to i32
    %c0_i32_0 = arith.constant 0 : i32
    %2 = arith.cmpi ne, %1, %c0_i32_0 : i32
    scf.if %2 {
      %cst = arith.constant 0.000000e+00 : f32
      %18 = vector.broadcast %cst : f32 to vector<4x128xf32>
      %c0_10 = arith.constant 0 : index
      %c0_11 = arith.constant 0 : index
      %19 = vector.load %arg5[%c0_10, %c0_11] : memref<4x128xf32, #tpu.memory_space<vmem>>, vector<4x128xf32>
      tpu.vector_store %arg5[%c0_10, %c0_11], %18 {strides = array<i32>} : memref<4x128xf32, #tpu.memory_space<vmem>>, vector<4x128xf32>,
      %cst_12 = arith.constant 0.000000e+00 : f32
      %20 = vector.broadcast %cst_12 : f32 to vector<4x128xf32>
      %c0_13 = arith.constant 0 : index
      %c0_14 = arith.constant 0 : index
      %21 = vector.load %arg6[%c0_13, %c0_14] : memref<4x128xf32, #tpu.memory_space<vmem>>, vector<4x128xf32>
      tpu.vector_store %arg6[%c0_13, %c0_14], %20 {strides = array<i32>} : memref<4x128xf32, #tpu.memory_space<vmem>>, vector<4x128xf32>,
    } else {
    }
    %c0 = arith.constant 0 : index
    %c0_1 = arith.constant 0 : index
    %3 = vector.load %arg2[%c0, %c0_1] : memref<4x128xf32, #tpu.memory_space<vmem>>, vector<4x128xf32>
    %c0_2 = arith.constant 0 : index
    %c0_3 = arith.constant 0 : index
    %4 = vector.load %arg3[%c0_2, %c0_3] : memref<4x128xf32, #tpu.memory_space<vmem>>, vector<4x128xf32>
    %c1_i32 = arith.constant 1 : i32
    %5 = arith.muli %arg0, %c1_i32 : i32
    %6 = arith.addi %5, %arg1 : i32
    %c1_i32_4 = arith.constant 1 : i32
    %7 = arith.addi %6, %c1_i32_4 : i32
    %c4_i32 = arith.constant 4 : i32
    %8 = arith.muli %7, %c4_i32 : i32
    %c4_i32_5 = arith.constant 4 : i32
    %9 = arith.cmpi sgt, %8, %c4_i32_5 : i32
    %true = arith.constant true
    %10 = arith.xori %9, %true : i1
    %11 = arith.extui %10 : i1 to i32
    %c0_i32_6 = arith.constant 0 : i32
    %12 = arith.cmpi ne, %11, %c0_i32_6 : i32
    scf.if %12 {
      %c0_10 = arith.constant 0 : index
      %c0_11 = arith.constant 0 : index
      %18 = vector.load %arg5[%c0_10, %c0_11] : memref<4x128xf32, #tpu.memory_space<vmem>>, vector<4x128xf32>
      %19 = arith.mulf %3, %4 : vector<4x128xf32>
      %20 = vector.shape_cast %19 : vector<4x128xf32> to vector<1x4x128xf32>
      %cst = arith.constant dense<0.000000e+00> : vector<4x128xf32>
      %21 = vector.multi_reduction <add>, %20, %cst [0] : vector<1x4x128xf32> to vector<4x128xf32>
      %22 = arith.addf %18, %21 : vector<4x128xf32>
      %c0_12 = arith.constant 0 : index
      %c0_13 = arith.constant 0 : index
      %23 = vector.load %arg5[%c0_12, %c0_13] : memref<4x128xf32, #tpu.memory_space<vmem>>, vector<4x128xf32>
      tpu.vector_store %arg5[%c0_12, %c0_13], %22 {strides = array<i32>} : memref<4x128xf32, #tpu.memory_space<vmem>>, vector<4x128xf32>,
      %c0_14 = arith.constant 0 : index
      %c0_15 = arith.constant 0 : index
      %24 = vector.load %arg6[%c0_14, %c0_15] : memref<4x128xf32, #tpu.memory_space<vmem>>, vector<4x128xf32>
      %25 = arith.addf %3, %4 : vector<4x128xf32>
      %26 = vector.shape_cast %25 : vector<4x128xf32> to vector<1x4x128xf32>
      %cst_16 = arith.constant dense<0.000000e+00> : vector<4x128xf32>
      %27 = vector.multi_reduction <add>, %26, %cst_16 [0] : vector<1x4x128xf32> to vector<4x128xf32>
      %28 = arith.addf %24, %27 : vector<4x128xf32>
      %c0_17 = arith.constant 0 : index
      %c0_18 = arith.constant 0 : index
      %29 = vector.load %arg6[%c0_17, %c0_18] : memref<4x128xf32, #tpu.memory_space<vmem>>, vector<4x128xf32>
      tpu.vector_store %arg6[%c0_17, %c0_18], %28 {strides = array<i32>} : memref<4x128xf32, #tpu.memory_space<vmem>>, vector<4x128xf32>,
    } else {
    }
    %13 = arith.extui %9 : i1 to i32
    %c0_i32_7 = arith.constant 0 : i32
    %14 = arith.cmpi ne, %13, %c0_i32_7 : i32
    scf.if %14 {
      %18 = tpu.iota {dimensions = array<i32: 0>} : vector<4x1xi32>
      %c4_i32_10 = arith.constant 4 : i32
      %19 = arith.muli %6, %c4_i32_10 : i32
      %20 = vector.broadcast %19 : i32 to vector<4x1xi32>
      %21 = arith.addi %18, %20 : vector<4x1xi32>
      %c4_i32_11 = arith.constant 4 : i32
      %22 = vector.broadcast %c4_i32_11 : i32 to vector<4x1xi32>
      %23 = arith.cmpi slt, %21, %22 : vector<4x1xi32>
      %cst = arith.constant 0.000000e+00 : f32
      %24 = vector.shape_cast %23 : vector<4x1xi1> to vector<4x1xi1>
      %25 = vector.broadcast %24 : vector<4x1xi1> to vector<4x128xi1>
      %26 = vector.broadcast %cst : f32 to vector<4x128xf32>
      %27 = arith.select %25, %3, %26 : vector<4x128xi1>, vector<4x128xf32>
      %cst_12 = arith.constant 0.000000e+00 : f32
      %28 = vector.shape_cast %23 : vector<4x1xi1> to vector<4x1xi1>
      %29 = vector.broadcast %28 : vector<4x1xi1> to vector<4x128xi1>
      %30 = vector.broadcast %cst_12 : f32 to vector<4x128xf32>
      %31 = arith.select %29, %4, %30 : vector<4x128xi1>, vector<4x128xf32>
      %c0_13 = arith.constant 0 : index
      %c0_14 = arith.constant 0 : index
      %32 = vector.load %arg5[%c0_13, %c0_14] : memref<4x128xf32, #tpu.memory_space<vmem>>, vector<4x128xf32>
      %33 = arith.mulf %27, %31 : vector<4x128xf32>
      %34 = vector.shape_cast %33 : vector<4x128xf32> to vector<1x4x128xf32>
      %cst_15 = arith.constant dense<0.000000e+00> : vector<4x128xf32>
      %35 = vector.multi_reduction <add>, %34, %cst_15 [0] : vector<1x4x128xf32> to vector<4x128xf32>
      %36 = arith.addf %32, %35 : vector<4x128xf32>
      %c0_16 = arith.constant 0 : index
      %c0_17 = arith.constant 0 : index
      %37 = vector.load %arg5[%c0_16, %c0_17] : memref<4x128xf32, #tpu.memory_space<vmem>>, vector<4x128xf32>
      tpu.vector_store %arg5[%c0_16, %c0_17], %36 {strides = array<i32>} : memref<4x128xf32, #tpu.memory_space<vmem>>, vector<4x128xf32>,
      %c0_18 = arith.constant 0 : index
      %c0_19 = arith.constant 0 : index
      %38 = vector.load %arg6[%c0_18, %c0_19] : memref<4x128xf32, #tpu.memory_space<vmem>>, vector<4x128xf32>
      %39 = arith.addf %27, %31 : vector<4x128xf32>
      %40 = vector.shape_cast %39 : vector<4x128xf32> to vector<1x4x128xf32>
      %cst_20 = arith.constant dense<0.000000e+00> : vector<4x128xf32>
      %41 = vector.multi_reduction <add>, %40, %cst_20 [0] : vector<1x4x128xf32> to vector<4x128xf32>
      %42 = arith.addf %38, %41 : vector<4x128xf32>
      %c0_21 = arith.constant 0 : index
      %c0_22 = arith.constant 0 : index
      %43 = vector.load %arg6[%c0_21, %c0_22] : memref<4x128xf32, #tpu.memory_space<vmem>>, vector<4x128xf32>
      tpu.vector_store %arg6[%c0_21, %c0_22], %42 {strides = array<i32>} : memref<4x128xf32, #tpu.memory_space<vmem>>, vector<4x128xf32>,
    } else {
    }
    %c0_i32_8 = arith.constant 0 : i32
    %15 = arith.cmpi eq, %arg1, %c0_i32_8 : i32
    %16 = arith.extui %15 : i1 to i32
    %c0_i32_9 = arith.constant 0 : i32
    %17 = arith.cmpi ne, %16, %c0_i32_9 : i32
    scf.if %17 {
      %c0_10 = arith.constant 0 : index
      %c0_11 = arith.constant 0 : index
      %18 = vector.load %arg5[%c0_10, %c0_11] : memref<4x128xf32, #tpu.memory_space<vmem>>, vector<4x128xf32>
      %c0_12 = arith.constant 0 : index
      %c0_13 = arith.constant 0 : index
      %c0_14 = arith.constant 0 : index
      %c0_15 = arith.constant 0 : index
      %19 = vector.load %arg4[%c0_12, %c0_13, %c0_14, %c0_15] : memref<1x2x4x128xf32, #tpu.memory_space<vmem>>, vector<1x1x4x128xf32>
      %20 = vector.shape_cast %19 : vector<1x1x4x128xf32> to vector<4x128xf32>
      %21 = vector.shape_cast %18 : vector<4x128xf32> to vector<1x1x4x128xf32>
      tpu.vector_store %arg4[%c0_12, %c0_13, %c0_14, %c0_15], %21 {strides = array<i32>} : memref<1x2x4x128xf32, #tpu.memory_space<vmem>>, vector<1x1x4x128xf32>,
      %c0_16 = arith.constant 0 : index
      %c0_17 = arith.constant 0 : index
      %22 = vector.load %arg6[%c0_16, %c0_17] : memref<4x128xf32, #tpu.memory_space<vmem>>, vector<4x128xf32>
      %c0_18 = arith.constant 0 : index
      %c1 = arith.constant 1 : index
      %c0_19 = arith.constant 0 : index
      %c0_20 = arith.constant 0 : index
      %23 = vector.load %arg4[%c0_18, %c1, %c0_19, %c0_20] : memref<1x2x4x128xf32, #tpu.memory_space<vmem>>, vector<1x1x4x128xf32>
      %24 = vector.shape_cast %23 : vector<1x1x4x128xf32> to vector<4x128xf32>
      %25 = vector.shape_cast %22 : vector<4x128xf32> to vector<1x1x4x128xf32>
      tpu.vector_store %arg4[%c0_18, %c1, %c0_19, %c0_20], %25 {strides = array<i32>} : memref<1x2x4x128xf32, #tpu.memory_space<vmem>>, vector<1x1x4x128xf32>,
    } else {
    }
    return
  }
  func.func @transform_0(%arg0: i32, %arg1: i32) -> (i32, i32) {
    %c1_i32 = arith.constant 1 : i32
    %0 = arith.muli %arg0, %c1_i32 : i32
    %1 = arith.addi %0, %arg1 : i32
    %c0_i32 = arith.constant 0 : i32
    %2 = arith.minsi %1, %c0_i32 : i32
    %c0_i32_0 = arith.constant 0 : i32
    %c0_i32_1 = arith.constant 0 : i32
    return %2, %c0_i32_0 : i32, i32
  }
  func.func @transform_1(%arg0: i32, %arg1: i32) -> (i32, i32) {
    %c1_i32 = arith.constant 1 : i32
    %0 = arith.muli %arg0, %c1_i32 : i32
    %1 = arith.addi %0, %arg1 : i32
    %c0_i32 = arith.constant 0 : i32
    %2 = arith.minsi %1, %c0_i32 : i32
    %c0_i32_0 = arith.constant 0 : i32
    %c0_i32_1 = arith.constant 0 : i32
    return %2, %c0_i32_0 : i32, i32
  }
  func.func @transform_2(%arg0: i32, %arg1: i32) -> (i32, i32, i32, i32) {
    %c0_i32 = arith.constant 0 : i32
    %c0_i32_0 = arith.constant 0 : i32
    %c0_i32_1 = arith.constant 0 : i32
    %c0_i32_2 = arith.constant 0 : i32
    return %arg0, %c0_i32, %c0_i32_0, %c0_i32_1 : i32, i32, i32, i32
  }
}

</mosaic_0001>

<llo_original>
// kernel: tpu_custom_call.1
$region0: #{tpu_custom_call.1}
  #allocation0 [shape = 'u32[]', space=smem, size = 0x4, offset = 0x4, fixed_abs, tag = 'smem constant byte address 0x4 - core index']
  #allocation1 [shape = 'u32[72,128]{1,0:T(1,128)}', space=vmem, size = 0x9000, scoped, tag = 'internal scratch']
  #allocation2 [shape = 'f32[4,128]{1,0:T(4,128)}', space=vmem, size = 0x800, scoped, tag = 'scratch operand']
  #allocation3 [shape = 'f32[4,128]{1,0:T(4,128)}', space=vmem, size = 0x800, scoped, tag = 'scratch operand']
  %s0 = inlined_call_operand.hbm [shape: f32[4,128], index: 0, kind: input, shape index: {}]
  %s1 = inlined_call_operand.hbm [shape: f32[4,128], index: 1, kind: input, shape index: {}]
  %s2 = inlined_call_operand.hbm [shape: f32[2,2,4,128], index: 2, kind: output, shape index: {}]
  %s3 = sld [smem:[#allocation0]]
  $region65: #{tpu_custom_call.1} parent=0
    _
  %s5 = ssub.s32 1, %s3
  %s6 = scalar_select 0, %s5, %s3
  $region1: #{tpu_custom_call.1} parent=0
    #allocation4 [shape = 'u8[4096]{0}', space=vmem, size = 0x1000, scoped, tag = 'input window, operand 0']
    #allocation5 [shape = 's32[2]{0}', space=sflag, size = 0x8, scoped, tag = 'scoped memory for tpu_custom_call.1']
    #allocation6 [shape = 's32[2]{0}', space=sflag, size = 0x8, scoped, tag = 'scoped memory for tpu_custom_call.1']
    #allocation7 [shape = 'u8[4096]{0}', space=vmem, size = 0x1000, scoped, tag = 'input window, operand 1']
    #allocation8 [shape = 's32[2]{0}', space=sflag, size = 0x8, scoped, tag = 'scoped memory for tpu_custom_call.1']
    #allocation9 [shape = 'u8[8192]{0}', space=vmem, size = 0x2000, scoped, tag = 'output window, operand 0']
    %7 = vsyncpa [#allocation5], 0
    %s8 = scalar_lea.sflag [#allocation5], 1
    %9 = vsyncpa %s8, 0
    %10 = vsyncpa [#allocation8], 0
    %s11 = scalar_lea.sflag [#allocation8], 1
    %12 = vsyncpa %s11, 0
    %13 = vsyncpa [#allocation6], 0
    %s14 = scalar_lea.sflag [#allocation6], 1
    %15 = vsyncpa %s14, 0
    loop: start=0, step=1, limit=4
    $region2: #{tpu_custom_call.1} parent=1 // loop_pre_header
      _
    $region3: #{tpu_custom_call.1} parent=1 // loop_header
      %s17 = sphi 0, %s21
      %p18 = scmp.ge.s32.totalorder %s17, 4
      %s24 = sphi 0, %s36
      %s25 = sphi 0, %s32
      %s26 = sphi 0, %s24
      %s27 = sphi 0, %s25
      %s28 = sphi 0, %s26
      %s29 = sphi 0, %s27
      %s45 = sphi 0, %s47
      %s48 = sphi 0, %s45
      %s49 = sphi 0, %s48
      %s65 = sphi 0, %s49
      %s77 = sphi 0, %s79
      %s80 = sphi 0, %s77
      %s81 = sphi 0, %s80
      %s97 = sphi 0, %s81
      %s103 = sphi 0, %s105
      %s106 = sphi 0, %s103
      %s107 = sphi 0, %s106
      %s123 = sphi 0, %s107
    $region4: #{tpu_custom_call.1} parent=1 // loop_header_branch
      %20 = sbr.rel (%p18) target = $region8
    $region5: #{tpu_custom_call.1} parent=1 // loop_body
      %s22 = ssub.s32 %s17, 1
      %s23 = ssub.s32 %s17, 2
      %s30 = sadd.s32 1, %s25
      %p31 = scmp.ge.s32.totalorder %s30, 1
      %s32 = scalar_select %p31, 0, %s30
      %s33 = sadd.s32 1, %s24
      %s34 = scalar_select %p31, %s33, %s24
      %p35 = scmp.ge.s32.totalorder %s34, 2
      %s36 = scalar_select %p35, 0, %s34
      %s37 = sadd.s32 %s24, %s25
      %p38 = scmp.lt.s32.totalorder %s37, 0
      %s39 = scalar_select %p38, %s37, 0
      %s40 = sadd.s32 %s36, %s32
      %p41 = scmp.lt.s32.totalorder %s40, 0
      %s42 = scalar_select %p41, %s40, 0
      %s43 = ssub.s32 %s39, %s42
      %p44 = scmp.eq.s32.totalorder %s43, 0
      %s46 = sadd.s32 %s45, 1
      %s47 = scalar_select %p44, %s45, %s46
      %p50 = pneg %p44
      %p51 = scmp.eq.s32.totalorder %s17, 1
      %p52 = por %p50, %p51
      %p53 = scmp.ne.s32.totalorder %s45, %s48
      %p54 = scmp.eq.s32.totalorder %s17, 0
      %p55 = por %p53, %p54
      %p56 = scmp.ne.s32.totalorder %s45, %s48
      %p57 = scmp.eq.s32.totalorder %s22, 1
      %p58 = por %p56, %p57
      %p59 = scmp.ne.s32.totalorder %s48, %s49
      %p60 = scmp.eq.s32.totalorder %s22, 0
      %p61 = por %p59, %p60
      %p62 = scmp.ne.s32.totalorder %s48, %s49
      %p63 = scmp.eq.s32.totalorder %s23, 1
      %p64 = por %p62, %p63
      %p66 = scmp.ne.s32.totalorder %s49, %s65
      %p67 = scmp.eq.s32.totalorder %s23, 0
      %p68 = por %p66, %p67
      %s69 = sadd.s32 %s24, %s25
      %p70 = scmp.lt.s32.totalorder %s69, 0
      %s71 = scalar_select %p70, %s69, 0
      %s72 = sadd.s32 %s36, %s32
      %p73 = scmp.lt.s32.totalorder %s72, 0
      %s74 = scalar_select %p73, %s72, 0
      %s75 = ssub.s32 %s71, %s74
      %p76 = scmp.eq.s32.totalorder %s75, 0
      %s78 = sadd.s32 %s77, 1
      %s79 = scalar_select %p76, %s77, %s78
      %p82 = pneg %p76
      %p83 = scmp.eq.s32.totalorder %s17, 1
      %p84 = por %p82, %p83
      %p85 = scmp.ne.s32.totalorder %s77, %s80
      %p86 = scmp.eq.s32.totalorder %s17, 0
      %p87 = por %p85, %p86
      %p88 = scmp.ne.s32.totalorder %s77, %s80
      %p89 = scmp.eq.s32.totalorder %s22, 1
      %p90 = por %p88, %p89
      %p91 = scmp.ne.s32.totalorder %s80, %s81
      %p92 = scmp.eq.s32.totalorder %s22, 0
      %p93 = por %p91, %p92
      %p94 = scmp.ne.s32.totalorder %s80, %s81
      %p95 = scmp.eq.s32.totalorder %s23, 1
      %p96 = por %p94, %p95
      %p98 = scmp.ne.s32.totalorder %s81, %s97
      %p99 = scmp.eq.s32.totalorder %s23, 0
      %p100 = por %p98, %p99
      %s101 = ssub.s32 %s24, %s36
      %p102 = scmp.eq.s32.totalorder %s101, 0
      %s104 = sadd.s32 %s103, 1
      %s105 = scalar_select %p102, %s103, %s104
      %p108 = pneg %p102
      %p109 = scmp.eq.s32.totalorder %s17, 1
      %p110 = por %p108, %p109
      %p111 = scmp.ne.s32.totalorder %s103, %s106
      %p112 = scmp.eq.s32.totalorder %s17, 0
      %p113 = por %p111, %p112
      %p114 = scmp.ne.s32.totalorder %s103, %s106
      %p115 = scmp.eq.s32.totalorder %s22, 1
      %p116 = por %p114, %p115
      %p117 = scmp.ne.s32.totalorder %s106, %s107
      %p118 = scmp.eq.s32.totalorder %s22, 0
      %p119 = por %p117, %p118
      %p120 = scmp.ne.s32.totalorder %s106, %s107
      %p121 = scmp.eq.s32.totalorder %s23, 1
      %p122 = por %p120, %p121
      %p124 = scmp.ne.s32.totalorder %s107, %s123
      %p125 = scmp.eq.s32.totalorder %s23, 0
      %p126 = por %p124, %p125
      %p127 = scmp.le.s32.totalorder 1, %s17
      %p128 = scmp.lt.s32.totalorder %s17, 3
      %p129 = pnand %p127, %p128
      %p130 = pneg %p129
      // Predicated region
      $region9: #{tpu_custom_call.1} parent=5 // pred_check
        _
      $region10: #{tpu_custom_call.1} parent=5 // pred_check_branch
        %132 = sbr.rel (%p129) target = $region12
      $region11: #{tpu_custom_call.1} parent=5 // pred_region
        %s133 = ssub.s32 %s17, 1
      $region12: #{tpu_custom_call.1} parent=5 // pred_fallthru
        _
      %p134 = scmp.lt.s32.totalorder %s17, 2
      // Predicated region
      $region13: #{tpu_custom_call.1} parent=5 // pred_check
        %p135 = pneg %p134
      $region14: #{tpu_custom_call.1} parent=5 // pred_check_branch
        %137 = sbr.rel (%p135) target = $region16
      $region15: #{tpu_custom_call.1} parent=5 // pred_region
        // Predicated region
        $region17: #{tpu_custom_call.1} parent=15 // pred_check
          %p138 = pneg %p55
        $region18: #{tpu_custom_call.1} parent=15 // pred_check_branch
          %140 = sbr.rel (%p138) target = $region20
        $region19: #{tpu_custom_call.1} parent=15 // pred_region
          %s141 = sand.u32 %s45, 1
          %s142 = scalar_lea.sflag [#allocation5], %s141
          %s143 = sand.u32 %s45, 1
          %s144 = smul.addr %s143, 4
          %s145 = scalar_lea.vmem [#allocation4], %s144
          %s146 = sadd.s32 %s24, %s25
          %p147 = scmp.lt.s32.totalorder %s146, 0
          %s148 = scalar_select %p147, %s146, 0
          %150 = vsyncadd %s142, 0
          %s151 = smul.addr %s148, 4
          %s152 = scalar_lea.hbm %s0, %s151
          %s154 = sshll.u32 %s152, 4
          %s155 = int_to_ptr.hbm [resolvable:$true] %s154
          %s156 = sshll.u32 %s145, 4
          %s157 = int_to_ptr.vmem [resolvable:$true] %s156
          %159 = dma.hbm_to_vmem [thread:$0]  %s155, 64, %s157, %s142
        $region20: #{tpu_custom_call.1} parent=15 // pred_fallthru
          _
        // Predicated region
        $region21: #{tpu_custom_call.1} parent=15 // pred_check
          %p160 = pneg %p87
        $region22: #{tpu_custom_call.1} parent=15 // pred_check_branch
          %162 = sbr.rel (%p160) target = $region24
        $region23: #{tpu_custom_call.1} parent=15 // pred_region
          %s163 = sand.u32 %s77, 1
          %s164 = scalar_lea.sflag [#allocation8], %s163
          %s165 = sand.u32 %s77, 1
          %s166 = smul.addr %s165, 4
          %s167 = scalar_lea.vmem [#allocation7], %s166
          %s168 = sadd.s32 %s24, %s25
          %p169 = scmp.lt.s32.totalorder %s168, 0
          %s170 = scalar_select %p169, %s168, 0
          %172 = vsyncadd %s164, 0
          %s173 = smul.addr %s170, 4
          %s174 = scalar_lea.hbm %s1, %s173
          %s176 = sshll.u32 %s174, 4
          %s177 = int_to_ptr.hbm [resolvable:$true] %s176
          %s178 = sshll.u32 %s167, 4
          %s179 = int_to_ptr.vmem [resolvable:$true] %s178
          %181 = dma.hbm_to_vmem [thread:$0]  %s177, 64, %s179, %s164
        $region24: #{tpu_custom_call.1} parent=15 // pred_fallthru
          _
      $region16: #{tpu_custom_call.1} parent=5 // pred_fallthru
        _
      %p182 = scmp.le.s32.totalorder 1, %s17
      %p183 = scmp.lt.s32.totalorder %s17, 3
      %p184 = pnand %p182, %p183
      %p185 = pneg %p184
      // Predicated region
      $region25: #{tpu_custom_call.1} parent=5 // pred_check
        _
      $region26: #{tpu_custom_call.1} parent=5 // pred_check_branch
        %187 = sbr.rel (%p184) target = $region28
      $region27: #{tpu_custom_call.1} parent=5 // pred_region
        %s188 = ssub.s32 %s17, 1
        %s189 = sand.u32 %s48, 1
        %s190 = scalar_lea.sflag [#allocation5], %s189
        %s191 = sand.u32 %s48, 1
        %s192 = smul.addr %s191, 4
        %s193 = scalar_lea.vmem [#allocation4], %s192
        // Predicated region
        $region29: #{tpu_custom_call.1} parent=27 // pred_check
          %p194 = pneg %p61
        $region30: #{tpu_custom_call.1} parent=27 // pred_check_branch
          %196 = sbr.rel (%p194) target = $region32
        $region31: #{tpu_custom_call.1} parent=27 // pred_region
          %198 = dma.done %s190, 64
        $region32: #{tpu_custom_call.1} parent=27 // pred_fallthru
          _
        %s199 = sand.u32 %s80, 1
        %s200 = scalar_lea.sflag [#allocation8], %s199
        %s201 = sand.u32 %s80, 1
        %s202 = smul.addr %s201, 4
        %s203 = scalar_lea.vmem [#allocation7], %s202
        // Predicated region
        $region33: #{tpu_custom_call.1} parent=27 // pred_check
          %p204 = pneg %p93
        $region34: #{tpu_custom_call.1} parent=27 // pred_check_branch
          %206 = sbr.rel (%p204) target = $region36
        $region35: #{tpu_custom_call.1} parent=27 // pred_region
          %208 = dma.done %s200, 64
        $region36: #{tpu_custom_call.1} parent=27 // pred_fallthru
          _
        %s209 = sand.u32 %s48, 1
        %s210 = scalar_lea.sflag [#allocation5], %s209
        %s211 = sand.u32 %s48, 1
        %s212 = smul.addr %s211, 4
        %s213 = scalar_lea.vmem [#allocation4], %s212
        %p214 = pneg %p61
        %p215 = pneg %p58
        %s216 = sand.u32 %s80, 1
        %s217 = scalar_lea.sflag [#allocation8], %s216
        %s218 = sand.u32 %s80, 1
        %s219 = smul.addr %s218, 4
        %s220 = scalar_lea.vmem [#allocation7], %s219
        %p221 = pneg %p93
        %p222 = pneg %p90
        %p223 = pneg %p119
        %p224 = pneg %p116
        %s225 = sand.u32 %s106, 1
        %s226 = scalar_lea.sflag [#allocation6], %s225
        %s227 = sand.u32 %s106, 1
        %s228 = smul.addr %s227, 8
        %s229 = scalar_lea.vmem [#allocation9], %s228
        %s230 = sadd.s32 %s26, %s27
        %p231 = scmp.lt.s32.totalorder %s230, 0
        %s232 = scalar_select %p231, %s230, 0
        %s233 = sadd.s32 %s26, %s27
        %p234 = scmp.lt.s32.totalorder %s233, 0
        %s235 = scalar_select %p234, %s233, 0
        %p236 = scmp.eq.s32.totalorder %s27, 0
        // Predicated region
        $region37: #{tpu_custom_call.1} parent=27 // pred_check
          %p237 = pneg %p236
        $region38: #{tpu_custom_call.1} parent=27 // pred_check_branch
          %239 = sbr.rel (%p237) target = $region40
        $region39: #{tpu_custom_call.1} parent=27 // pred_region
          %240 = vst [vmem:[#allocation2] sm:$0xf] 0.0
          %241 = vst [vmem:[#allocation3] sm:$0xf] 0.0
        $region40: #{tpu_custom_call.1} parent=27 // pred_fallthru
          _
        %v242 = vld [vmem:[%s193] sm:$0xf]
        %v243 = vld [vmem:[%s203] sm:$0xf]
        %s244 = sadd.s32 %s26, %s27
        %s245 = sadd.s32 %s244, 1
        %s246 = smul.u32 %s245, 4
        %p247 = scmp.gt.s32.totalorder %s246, 4
        %p248 = scmp.le.s32.totalorder %s246, 4
        // Predicated region
        $region41: #{tpu_custom_call.1} parent=27 // pred_check
          %p249 = pneg %p248
        $region42: #{tpu_custom_call.1} parent=27 // pred_check_branch
          %251 = sbr.rel (%p249) target = $region44
        $region43: #{tpu_custom_call.1} parent=27 // pred_region
          %v252 = vld [vmem:[#allocation2] sm:$0xf]
          %v253 = vmul.f32 %v242, %v243
          %v254 = vadd.f32 %v253, 0.0
          %v255 = vadd.f32 %v252, %v254
          %256 = vst [vmem:[#allocation2] sm:$0xf] %v255
          %v257 = vld [vmem:[#allocation3] sm:$0xf]
          %v258 = vadd.f32 %v242, %v243
          %v259 = vadd.f32 %v258, 0.0
          %v260 = vadd.f32 %v257, %v259
          %261 = vst [vmem:[#allocation3] sm:$0xf] %v260
        $region44: #{tpu_custom_call.1} parent=27 // pred_fallthru
          _
        // Predicated region
        $region45: #{tpu_custom_call.1} parent=27 // pred_check
          %p262 = pneg %p247
        $region46: #{tpu_custom_call.1} parent=27 // pred_check_branch
          %264 = sbr.rel (%p262) target = $region48
        $region47: #{tpu_custom_call.1} parent=27 // pred_region
          %v265 = vlaneseq
          %v266 = vshrl.u32 %v265, 7
          %s267 = smul.u32 %s244, 4
          %v268 = vstv %s267
          %v269 = vadd.s32 %v266, %v268
          %vm270 = vcmp.lt.s32.totalorder %v269, 4
          %v271 = vsel %vm270, 1, 0
          %vm272 = vcmp.eq.s32.totalorder %v271, 1
          %v273 = vsel %vm272, %v242, 0.0
          %v274 = vsel %vm272, %v243, 0.0
          %v275 = vld [vmem:[#allocation2] sm:$0xf]
          %v276 = vmul.f32 %v273, %v274
          %v277 = vadd.f32 %v276, 0.0
          %v278 = vadd.f32 %v275, %v277
          %279 = vst [vmem:[#allocation2] sm:$0xf] %v278
          %v280 = vld [vmem:[#allocation3] sm:$0xf]
          %v281 = vadd.f32 %v273, %v274
          %v282 = vadd.f32 %v281, 0.0
          %v283 = vadd.f32 %v280, %v282
          %284 = vst [vmem:[#allocation3] sm:$0xf] %v283
        $region48: #{tpu_custom_call.1} parent=27 // pred_fallthru
          _
        // Predicated region
        $region49: #{tpu_custom_call.1} parent=27 // pred_check
          %p285 = pneg %p236
        $region50: #{tpu_custom_call.1} parent=27 // pred_check_branch
          %287 = sbr.rel (%p285) target = $region52
        $region51: #{tpu_custom_call.1} parent=27 // pred_region
          %v288 = vld [vmem:[#allocation2] sm:$0xf]
          %289 = vst [vmem:[%s229] sm:$0xf] %v288
          %v290 = vld [vmem:[#allocation3] sm:$0xf]
          %s291 = scalar_lea.vmem %s229, 4 [#allocation9]
          %292 = vst [vmem:[%s291] sm:$0xf] %v290
        $region52: #{tpu_custom_call.1} parent=27 // pred_fallthru
          _
        %s293 = sand.u32 %s106, 1
        %s294 = scalar_lea.sflag [#allocation6], %s293
        %s295 = sand.u32 %s106, 1
        %s296 = smul.addr %s295, 8
        %s297 = scalar_lea.vmem [#allocation9], %s296
        // Predicated region
        $region53: #{tpu_custom_call.1} parent=27 // pred_check
          %p298 = pneg %p116
        $region54: #{tpu_custom_call.1} parent=27 // pred_check_branch
          %300 = sbr.rel (%p298) target = $region56
        $region55: #{tpu_custom_call.1} parent=27 // pred_region
          %302 = vsyncadd %s294, 0
          %s303 = smul.addr %s26, 2
          %s304 = smul.addr %s303, 4
          %s305 = scalar_lea.hbm %s2, %s304
          %s306 = sshll.u32 %s297, 4
          %s307 = int_to_ptr.vmem [resolvable:$true] %s306
          %s308 = sshll.u32 %s305, 4
          %s309 = int_to_ptr.hbm [resolvable:$true] %s308
          %314 = dma.vmem_to_hbm [thread:$0]  %s307, 128, %s309, %s294, 64, 64, 4
        $region56: #{tpu_custom_call.1} parent=27 // pred_fallthru
          _
      $region28: #{tpu_custom_call.1} parent=5 // pred_fallthru
        _
      %p315 = scmp.le.s32.totalorder 2, %s17
      // Predicated region
      $region57: #{tpu_custom_call.1} parent=5 // pred_check
        %p316 = pneg %p315
      $region58: #{tpu_custom_call.1} parent=5 // pred_check_branch
        %318 = sbr.rel (%p316) target = $region60
      $region59: #{tpu_custom_call.1} parent=5 // pred_region
        %s319 = ssub.s32 %s17, 2
        // Predicated region
        $region61: #{tpu_custom_call.1} parent=59 // pred_check
          %p320 = pneg %p122
        $region62: #{tpu_custom_call.1} parent=59 // pred_check_branch
          %322 = sbr.rel (%p320) target = $region64
        $region63: #{tpu_custom_call.1} parent=59 // pred_region
          %s323 = sand.u32 %s107, 1
          %s324 = scalar_lea.sflag [#allocation6], %s323
          %s325 = sand.u32 %s107, 1
          %s326 = smul.addr %s325, 8
          %s327 = scalar_lea.vmem [#allocation9], %s326
          %329 = dma.done %s324, 128
        $region64: #{tpu_custom_call.1} parent=59 // pred_fallthru
          _
      $region60: #{tpu_custom_call.1} parent=5 // pred_fallthru
        _
    $region6: #{tpu_custom_call.1} parent=1 // loop_footer
      %s21 = sadd.s32 1, %s17
    $region7: #{tpu_custom_call.1} parent=1 // loop_footer_branch
      %16 = sbr.rel target = $region3
    $region8: #{tpu_custom_call.1} parent=1 // loop_exit
      _
    %330 = vsyncpa [#allocation5], 1
    %s331 = scalar_lea.sflag [#allocation5], 1
    %332 = vsyncpa %s331, 1
    %333 = vsyncpa [#allocation8], 1
    %s334 = scalar_lea.sflag [#allocation8], 1
    %335 = vsyncpa %s334, 1
    %336 = vsyncpa [#allocation6], 1
    %s337 = scalar_lea.sflag [#allocation6], 1
    %338 = vsyncpa %s337, 1

</llo_original>
